<compile_context>
chip_gen: v5e
topology: v5e:2x2
jax: 0.10.0
libtpu: 0.0.40
codegen_flags: <defaults>
</compile_context>

<pallas_src>
import functools

import jax
import jax.numpy as jnp
from jax import lax
from jax.experimental import pallas as pl
from jax.experimental.pallas import tpu as pltpu


def _round_up(x, m):
    return (x + m - 1) // m * m


def _largest_divisor_leq(n, k):
    k = max(1, min(int(k), int(n)))
    for d in range(k, 0, -1):
        if n % d == 0:
            return d
    return 1


def _spectral_sigma(w2d, u0, n_power_iterations=1, eps=1e-12):
    """Power-iteration spectral norm sigma (tiny parameter-side glue, plain JAX)."""
    u = u0 / (jnp.linalg.norm(u0) + eps)
    v = None
    for _ in range(max(int(n_power_iterations), 1)):
        v = w2d.T @ u
        v = v / (jnp.linalg.norm(v) + eps)
        u = w2d @ v
        u = u / (jnp.linalg.norm(u) + eps)
    return u @ (w2d @ v)


def _conv_stats_kernel(w_ref, x_ref, conv_ref, psum_ref):
    """z = W @ patches (bf16 in, f32 acc); per-tile partial BN statistics."""
    z = jnp.dot(w_ref[...], x_ref[0],
                preferred_element_type=jnp.float32)        # (C_mid, tile_hw) f32
    conv_ref[0] = z.astype(conv_ref.dtype)                 # bf16 intermediate
    # Padded columns / channels are exactly zero -> contribute nothing; no masking.
    psum_ref[0, :, 0:1] = jnp.sum(z, axis=1, keepdims=True)
    psum_ref[0, :, 1:2] = jnp.sum(z * z, axis=1, keepdims=True)


def _bn_lrelu_kernel(z_ref, ss_ref, o_ref, *, negative_slope):
    """y = z*scale + shift (per-channel, folded BN+affine) then LeakyReLU; NCHW store."""
    c_out = o_ref.shape[1]
    z = z_ref[0].astype(jnp.float32)                       # (C_mid, tile_hw)
    y = z * ss_ref[:, 0:1] + ss_ref[:, 1:2]
    y = jnp.where(y >= 0.0, y, negative_slope * y)
    o_ref[0] = y[:c_out, :].astype(o_ref.dtype)


@functools.partial(
    jax.jit,
    static_argnames=("n_power_iterations", "sn_eps", "bn_eps", "negative_slope"))
def downblock_forward(x_nchw, weight, bias, gamma, beta, u_init, *,
                      n_power_iterations=1, sn_eps=1e-12, bn_eps=1e-5,
                      negative_slope=0.2):
    """x_nchw: (B, C_in, H, W) f32; weight: (C_out, C_in, 3, 3); bias/gamma/beta/u: (C_out,)."""
    B, C_in, H, W = x_nchw.shape
    C_out = weight.shape[0]
    H_out = (H + 2 - 3) // 2 + 1
    W_out = (W + 2 - 3) // 2 + 1
    HW = H_out * W_out
    K = C_in * 9
    M = B * HW                                   # true number of output pixels

    # --- spectral norm sigma. Under training-mode BN the conv bias and the positive
    # 1/sigma scale cancel exactly from the forward value once eps is rescaled by
    # sigma^2 below, so the kernels run on the raw weight and `bias` is unused.
    w2d = weight.reshape(C_out, K).astype(jnp.float32)
    sigma = _spectral_sigma(w2d, u_init.astype(jnp.float32),
                            n_power_iterations, sn_eps)
    del bias

    # --- lane/sublane-aligned sizes & tiles
    C_mid = _round_up(C_out, 16)                 # bf16 sublane packing
    K_p = _round_up(K, 16)
    HW_pad = _round_up(HW, 128)
    q = HW_pad // 128
    tile1 = 128 * _largest_divisor_leq(q, 4)     # GEMM pass: up to 512 lanes
    tile2 = 128 * _largest_divisor_leq(q, 16)    # BN pass:   up to 2048 lanes
    n1 = HW_pad // tile1
    n2 = HW_pad // tile2

    # --- patches, channel-major (B, K, HW): feature order (c_in, kh, kw) matches
    # weight.reshape(C_out, C_in*9); no large XLA transpose is needed.
    patches = lax.conv_general_dilated_patches(
        x_nchw.astype(jnp.float32), filter_shape=(3, 3),
        window_strides=(2, 2), padding=((1, 1), (1, 1)))
    patches = patches.reshape(B, K, HW)
    patches_p = jnp.zeros((B, K_p, HW_pad), jnp.bfloat16)
    patches_p = patches_p.at[:, :K, :HW].set(patches.astype(jnp.bfloat16))

    w_mat = jnp.zeros((C_mid, K_p), jnp.bfloat16)
    w_mat = w_mat.at[:C_out, :K].set(w2d.astype(jnp.bfloat16))

    cparams = pltpu.CompilerParams(
        dimension_semantics=("parallel", "parallel"),
        vmem_limit_bytes=32 * 1024 * 1024)

    # --- kernel 1: conv GEMM + per-tile partial BN statistics (fully parallel grid)
    conv_out, psum = pl.pallas_call(
        _conv_stats_kernel,
        out_shape=(jax.ShapeDtypeStruct((B, C_mid, HW_pad), jnp.bfloat16),
                   jax.ShapeDtypeStruct((B * n1, C_mid, 2), jnp.float32)),
        grid=(B, n1),
        in_specs=[
            pl.BlockSpec((C_mid, K_p), lambda b, j: (0, 0)),         # resident weight
            pl.BlockSpec((1, K_p, tile1), lambda b, j: (b, 0, j)),   # patches tile
        ],
        out_specs=(
            pl.BlockSpec((1, C_mid, tile1), lambda b, j: (b, 0, j)),     # conv tile
            pl.BlockSpec((1, C_mid, 2), lambda b, j: (b * n1 + j, 0, 0)),  # partial stats
        ),
        compiler_params=cparams,
    )(w_mat, patches_p)

    # --- fold batch stats + BN affine into per-channel scale/shift (tiny XLA ops).
    # eps is rescaled by sigma^2, which makes dropping the 1/sigma scale exact.
    stats = jnp.sum(psum, axis=0)                            # (C_mid, 2)
    mean = stats[:, 0] / M
    var = jnp.maximum(stats[:, 1] / M - mean * mean, 0.0)    # guard vs. cancellation
    gamma_p = jnp.zeros((C_mid,), jnp.float32).at[:C_out].set(gamma.astype(jnp.float32))
    beta_p = jnp.zeros((C_mid,), jnp.float32).at[:C_out].set(beta.astype(jnp.float32))
    inv_std = lax.rsqrt(var + bn_eps * sigma * sigma)
    scale = gamma_p * inv_std
    shift = beta_p - mean * scale
    ss = jnp.stack([scale, shift], axis=1)                   # (C_mid, 2)

    # --- kernel 2: BN apply + LeakyReLU, output written directly in NCHW layout
    out3 = pl.pallas_call(
        functools.partial(_bn_lrelu_kernel, negative_slope=negative_slope),
        out_shape=jax.ShapeDtypeStruct((B, C_out, HW_pad), jnp.float32),
        grid=(B, n2),
        in_specs=[
            pl.BlockSpec((1, C_mid, tile2), lambda b, j: (b, 0, j)),
            pl.BlockSpec((C_mid, 2), lambda b, j: (0, 0)),
        ],
        out_specs=pl.BlockSpec((1, C_out, tile2), lambda b, j: (b, 0, j)),
        compiler_params=cparams,
    )(conv_out, ss)

    return out3[:, :, :HW].reshape(B, C_out, H_out, W_out)


if __name__ == "__main__":
    key = jax.random.PRNGKey(0)
    k_x, k_w, k_b, k_u = jax.random.split(key, 4)

    B, C_in, C_out, H, W = 2, 4, 8, 16, 16
    x = jax.random.normal(k_x, (B, C_in, H, W), dtype=jnp.float32)

    fan_in = C_in * 9
    bound = 1.0 / (fan_in ** 0.5)
    weight = jax.random.uniform(k_w, (C_out, C_in, 3, 3), minval=-bound,
                                maxval=bound, dtype=jnp.float32)
    bias = jax.random.uniform(k_b, (C_out,), minval=-bound, maxval=bound,
                              dtype=jnp.float32)
    gamma = jnp.ones((C_out,), jnp.float32)      # BatchNorm2d affine defaults
    beta = jnp.zeros((C_out,), jnp.float32)
    u_init = jax.random.normal(k_u, (C_out,), dtype=jnp.float32)

    out = downblock_forward(x, weight, bias, gamma, beta, u_init)
    out = jax.block_until_ready(out)

    # --- plain-JAX f32 reference: spectral norm -> conv+bias -> train-mode BN -> LeakyReLU
    w2d = weight.reshape(C_out, -1)
    sigma = _spectral_sigma(w2d, u_init, 1, 1e-12)
    conv = lax.conv_general_dilated(
        x, weight / sigma, window_strides=(2, 2), padding=((1, 1), (1, 1)),
        dimension_numbers=("NCHW", "OIHW", "NCHW"),
        precision=lax.Precision.HIGHEST)
    conv = conv + bias[None, :, None, None]
    mean = conv.mean(axis=(0, 2, 3), keepdims=True)
    var = conv.var(axis=(0, 2, 3), keepdims=True)            # biased, as PyTorch BN
    y = (conv - mean) * lax.rsqrt(var + 1e-5) * gamma[None, :, None, None] \
        + beta[None, :, None, None]
    ref = jnp.where(y >= 0.0, y, 0.2 * y)

    H_out, W_out = (H + 1) // 2, (W + 1) // 2
    assert out.shape == (B, C_out, H_out, W_out), out.shape
    max_err = float(jnp.max(jnp.abs(out - ref)))
    mean_err = float(jnp.mean(jnp.abs(out - ref)))
    # bf16 GEMM + bf16 intermediate -> looser tolerance than a pure-f32 pipeline.
    assert max_err < 1e-1, (max_err, mean_err)
    assert mean_err < 2e-2, (max_err, mean_err)

    print("KERNEL_OK")
</pallas_src>

<mosaic_0001>
module attributes {stable_mosaic.version = 11 : i64} {
  func.func @_conv_stats_kernel(%arg0: i32, %arg1: i32, %arg2: memref<16x48xbf16, #tpu.memory_space<vmem>>, %arg3: memref<1x48x128xbf16, #tpu.memory_space<vmem>>, %arg4: memref<1x16x128xbf16, #tpu.memory_space<vmem>>, %arg5: memref<1x16x2xf32, #tpu.memory_space<vmem>>) attributes {dimension_semantics = [#tpu.dimension_semantics<parallel>, #tpu.dimension_semantics<parallel>], iteration_bounds = array<i64: 2, 1>, scalar_prefetch = 0 : i64, scratch_operands = 0 : i64, tpu.core_type = #tpu.core_type<tc>, window_params = [{pipeline_mode = #tpu.pipeline_mode<synchronous>, transform_indices = @transform_0, window_bounds = array<i64: 16, 48>}, {transform_indices = @transform_1, window_bounds = array<i64: 1, 48, 128>}, {transform_indices = @transform_2, window_bounds = array<i64: 1, 16, 128>}, {transform_indices = @transform_3, window_bounds = array<i64: 1, 16, 2>}]} {
    %c0 = arith.constant 0 : index
    %c0_0 = arith.constant 0 : index
    %0 = vector.load %arg2[%c0, %c0_0] : memref<16x48xbf16, #tpu.memory_space<vmem>>, vector<16x48xbf16>
    %c0_1 = arith.constant 0 : index
    %c0_2 = arith.constant 0 : index
    %c0_3 = arith.constant 0 : index
    %1 = vector.load %arg3[%c0_1, %c0_2, %c0_3] : memref<1x48x128xbf16, #tpu.memory_space<vmem>>, vector<1x48x128xbf16>
    %2 = vector.shape_cast %1 : vector<1x48x128xbf16> to vector<48x128xbf16>
    %cst = arith.constant dense<0.000000e+00> : vector<16x128xf32>
    %3 = tpu.matmul %0, %2, %cst {dimension_numbers = #tpu.dot_dimension_numbers<[1], [0], [0], [1], [0, 0, 1, 1], [], []>} : vector<16x48xbf16>, vector<48x128xbf16>, vector<16x128xf32> -> vector<16x128xf32>
    %4 = arith.truncf %3 : vector<16x128xf32> to vector<16x128xbf16>
    %c0_4 = arith.constant 0 : index
    %c0_5 = arith.constant 0 : index
    %c0_6 = arith.constant 0 : index
    %5 = vector.load %arg4[%c0_4, %c0_5, %c0_6] : memref<1x16x128xbf16, #tpu.memory_space<vmem>>, vector<1x16x128xbf16>
    %6 = vector.shape_cast %5 : vector<1x16x128xbf16> to vector<16x128xbf16>
    %7 = vector.shape_cast %4 : vector<16x128xbf16> to vector<1x16x128xbf16>
    tpu.vector_store %arg4[%c0_4, %c0_5, %c0_6], %7 {strides = array<i32>} : memref<1x16x128xbf16, #tpu.memory_space<vmem>>, vector<1x16x128xbf16>,
    %cst_7 = arith.constant dense<0.000000e+00> : vector<16xf32>
    %8 = vector.multi_reduction <add>, %3, %cst_7 [1] : vector<16x128xf32> to vector<16xf32>
    %9 = vector.shape_cast %8 : vector<16xf32> to vector<16x1xf32>
    %c0_8 = arith.constant 0 : index
    %c0_9 = arith.constant 0 : index
    %c0_10 = arith.constant 0 : index
    %10 = vector.load %arg5[%c0_8, %c0_9, %c0_10] : memref<1x16x2xf32, #tpu.memory_space<vmem>>, vector<1x16x1xf32>
    %11 = vector.shape_cast %10 : vector<1x16x1xf32> to vector<16x1xf32>
    %12 = vector.shape_cast %9 : vector<16x1xf32> to vector<1x16x1xf32>
    tpu.vector_store %arg5[%c0_8, %c0_9, %c0_10], %12 {strides = array<i32>} : memref<1x16x2xf32, #tpu.memory_space<vmem>>, vector<1x16x1xf32>,
    %13 = arith.mulf %3, %3 : vector<16x128xf32>
    %cst_11 = arith.constant dense<0.000000e+00> : vector<16xf32>
    %14 = vector.multi_reduction <add>, %13, %cst_11 [1] : vector<16x128xf32> to vector<16xf32>
    %15 = vector.shape_cast %14 : vector<16xf32> to vector<16x1xf32>
    %c0_12 = arith.constant 0 : index
    %c0_13 = arith.constant 0 : index
    %c1 = arith.constant 1 : index
    %16 = vector.load %arg5[%c0_12, %c0_13, %c1] : memref<1x16x2xf32, #tpu.memory_space<vmem>>, vector<1x16x1xf32>
    %17 = vector.shape_cast %16 : vector<1x16x1xf32> to vector<16x1xf32>
    %18 = vector.shape_cast %15 : vector<16x1xf32> to vector<1x16x1xf32>
    tpu.vector_store %arg5[%c0_12, %c0_13, %c1], %18 {strides = array<i32>} : memref<1x16x2xf32, #tpu.memory_space<vmem>>, vector<1x16x1xf32>,
    return
  }
  func.func @transform_0(%arg0: i32, %arg1: i32) -> (i32, i32) {
    %c0_i32 = arith.constant 0 : i32
    %c0_i32_0 = arith.constant 0 : i32
    %c0_i32_1 = arith.constant 0 : i32
    return %c0_i32, %c0_i32_0 : i32, i32
  }
  func.func @transform_1(%arg0: i32, %arg1: i32) -> (i32, i32, i32) {
    %c0_i32 = arith.constant 0 : i32
    %c0_i32_0 = arith.constant 0 : i32
    return %arg0, %c0_i32, %arg1 : i32, i32, i32
  }
  func.func @transform_2(%arg0: i32, %arg1: i32) -> (i32, i32, i32) {
    %c0_i32 = arith.constant 0 : i32
    %c0_i32_0 = arith.constant 0 : i32
    return %arg0, %c0_i32, %arg1 : i32, i32, i32
  }
  func.func @transform_3(%arg0: i32, %arg1: i32) -> (i32, i32, i32) {
    %c1_i32 = arith.constant 1 : i32
    %0 = arith.muli %arg0, %c1_i32 : i32
    %1 = arith.addi %0, %arg1 : i32
    %c0_i32 = arith.constant 0 : i32
    %c0_i32_0 = arith.constant 0 : i32
    %c0_i32_1 = arith.constant 0 : i32
    return %1, %c0_i32, %c0_i32_0 : i32, i32, i32
  }
}

module attributes {stable_mosaic.version = 11 : i64} {
  func.func @_bn_lrelu_kernel(%arg0: i32, %arg1: i32, %arg2: memref<1x16x128xbf16, #tpu.memory_space<vmem>>, %arg3: memref<16x2xf32, #tpu.memory_space<vmem>>, %arg4: memref<1x8x128xf32, #tpu.memory_space<vmem>>) attributes {dimension_semantics = [#tpu.dimension_semantics<parallel>, #tpu.dimension_semantics<parallel>], iteration_bounds = array<i64: 2, 1>, scalar_prefetch = 0 : i64, scratch_operands = 0 : i64, tpu.core_type = #tpu.core_type<tc>, window_params = [{transform_indices = @transform_0, window_bounds = array<i64: 1, 16, 128>}, {pipeline_mode = #tpu.pipeline_mode<synchronous>, transform_indices = @transform_1, window_bounds = array<i64: 16, 2>}, {transform_indices = @transform_2, window_bounds = array<i64: 1, 8, 128>}]} {
    %c0 = arith.constant 0 : index
    %c0_0 = arith.constant 0 : index
    %c0_1 = arith.constant 0 : index
    %0 = vector.load %arg2[%c0, %c0_0, %c0_1] : memref<1x16x128xbf16, #tpu.memory_space<vmem>>, vector<1x16x128xbf16>
    %1 = vector.shape_cast %0 : vector<1x16x128xbf16> to vector<16x128xbf16>
    %2 = arith.extf %1 : vector<16x128xbf16> to vector<16x128xf32>
    %c0_2 = arith.constant 0 : index
    %c0_3 = arith.constant 0 : index
    %3 = vector.load %arg3[%c0_2, %c0_3] : memref<16x2xf32, #tpu.memory_space<vmem>>, vector<16x1xf32>
    %4 = vector.broadcast %3 : vector<16x1xf32> to vector<16x128xf32>
    %5 = arith.mulf %2, %4 : vector<16x128xf32>
    %c0_4 = arith.constant 0 : index
    %c1 = arith.constant 1 : index
    %6 = vector.load %arg3[%c0_4, %c1] : memref<16x2xf32, #tpu.memory_space<vmem>>, vector<16x1xf32>
    %7 = vector.broadcast %6 : vector<16x1xf32> to vector<16x128xf32>
    %8 = arith.addf %5, %7 : vector<16x128xf32>
    %cst = arith.constant 0.000000e+00 : f32
    %9 = vector.broadcast %cst : f32 to vector<16x128xf32>
    %10 = arith.cmpf oge, %8, %9 : vector<16x128xf32>
    %cst_5 = arith.constant 2.000000e-01 : f32
    %11 = vector.broadcast %cst_5 : f32 to vector<16x128xf32>
    %12 = arith.mulf %11, %8 : vector<16x128xf32>
    %13 = arith.select %10, %8, %12 : vector<16x128xi1>, vector<16x128xf32>
    %14 = vector.extract_strided_slice %13 {offsets = [0, 0], sizes = [8, 128], strides = [1, 1]} : vector<16x128xf32> to vector<8x128xf32>
    %c0_6 = arith.constant 0 : index
    %c0_7 = arith.constant 0 : index
    %c0_8 = arith.constant 0 : index
    %15 = vector.load %arg4[%c0_6, %c0_7, %c0_8] : memref<1x8x128xf32, #tpu.memory_space<vmem>>, vector<1x8x128xf32>
    %16 = vector.shape_cast %15 : vector<1x8x128xf32> to vector<8x128xf32>
    %17 = vector.shape_cast %14 : vector<8x128xf32> to vector<1x8x128xf32>
    tpu.vector_store %arg4[%c0_6, %c0_7, %c0_8], %17 {strides = array<i32>} : memref<1x8x128xf32, #tpu.memory_space<vmem>>, vector<1x8x128xf32>,
    return
  }
  func.func @transform_0(%arg0: i32, %arg1: i32) -> (i32, i32, i32) {
    %c0_i32 = arith.constant 0 : i32
    %c0_i32_0 = arith.constant 0 : i32
    return %arg0, %c0_i32, %arg1 : i32, i32, i32
  }
  func.func @transform_1(%arg0: i32, %arg1: i32) -> (i32, i32) {
    %c0_i32 = arith.constant 0 : i32
    %c0_i32_0 = arith.constant 0 : i32
    %c0_i32_1 = arith.constant 0 : i32
    return %c0_i32, %c0_i32_0 : i32, i32
  }
  func.func @transform_2(%arg0: i32, %arg1: i32) -> (i32, i32, i32) {
    %c0_i32 = arith.constant 0 : i32
    %c0_i32_0 = arith.constant 0 : i32
    return %arg0, %c0_i32, %arg1 : i32, i32, i32
  }
}

</mosaic_0001>

<llo_original>
// kernel: downblock_forward.2
$region0: #{downblock_forward.2}
  #allocation0 [shape = 'u32[]', space=smem, size = 0x4, offset = 0x4, fixed_abs, tag = 'smem constant byte address 0x4 - core index']
  #allocation1 [shape = 'u32[72,128]{1,0:T(1,128)}', space=vmem, size = 0x9000, scoped, tag = 'internal scratch']
  %s0 = inlined_call_operand.vmem [shape: bf16[16,48], index: 0, kind: input, shape index: {}]
  %s1 = inlined_call_operand.vmem [shape: bf16[2,48,128], index: 1, kind: input, shape index: {}]
  %s2 = inlined_call_operand.vmem [shape: bf16[2,16,128], index: 2, kind: output, shape index: {0}]
  %s3 = inlined_call_operand.vmem [shape: f32[2,16,2], index: 3, kind: output, shape index: {1}]
  %4 = xla_tuple %s2, %s3
  %s5 = sld [smem:[#allocation0]]
  $region49: #{downblock_forward.2} parent=0
    _
  %s7 = ssub.s32 1, %s5
  %s8 = scalar_select 0, %s7, %s5
  loop: start=0, step=1, limit=4
  $region2: #{downblock_forward.2} parent=0 // loop_pre_header
    _
  $region3: #{downblock_forward.2} parent=0 // loop_header
    %s10 = sphi 0, %s14
    %p11 = scmp.ge.s32.totalorder %s10, 4
    %s17 = sphi 0, %s29
    %s18 = sphi 0, %s25
    %s19 = sphi 0, %s17
    %s20 = sphi 0, %s18
    %s21 = sphi 0, %s19
    %s22 = sphi 0, %s20
    %s30 = sphi 0, %s30
    %s32 = sphi 0, %s30
    %s33 = sphi 0, %s32
    %s47 = sphi 0, %s33
    %s55 = sphi 0, %s57
    %s58 = sphi 0, %s55
    %s59 = sphi 0, %s58
    %s75 = sphi 0, %s59
    %s83 = sphi 0, %s85
    %s86 = sphi 0, %s83
    %s87 = sphi 0, %s86
    %s103 = sphi 0, %s87
    %s111 = sphi 0, %s113
    %s114 = sphi 0, %s111
    %s115 = sphi 0, %s114
    %s131 = sphi 0, %s115
  $region4: #{downblock_forward.2} parent=0 // loop_header_branch
    %13 = sbr.rel (%p11) target = $region8
  $region5: #{downblock_forward.2} parent=0 // loop_body
    %s15 = ssub.s32 %s10, 1
    %s16 = ssub.s32 %s10, 2
    %s23 = sadd.s32 1, %s18
    %p24 = scmp.ge.s32.totalorder %s23, 1
    %s25 = scalar_select %p24, 0, %s23
    %s26 = sadd.s32 1, %s17
    %s27 = scalar_select %p24, %s26, %s17
    %p28 = scmp.ge.s32.totalorder %s27, 2
    %s29 = scalar_select %p28, 0, %s27
    %s31 = sadd.s32 %s30, 1
    %p34 = scmp.eq.s32.totalorder %s10, 1
    %p35 = scmp.ne.s32.totalorder %s30, %s32
    %p36 = scmp.eq.s32.totalorder %s10, 0
    %p37 = por %p35, %p36
    %p38 = scmp.ne.s32.totalorder %s30, %s32
    %p39 = scmp.eq.s32.totalorder %s15, 1
    %p40 = por %p38, %p39
    %p41 = scmp.ne.s32.totalorder %s32, %s33
    %p42 = scmp.eq.s32.totalorder %s15, 0
    %p43 = por %p41, %p42
    %p44 = scmp.ne.s32.totalorder %s32, %s33
    %p45 = scmp.eq.s32.totalorder %s16, 1
    %p46 = por %p44, %p45
    %p48 = scmp.ne.s32.totalorder %s33, %s47
    %p49 = scmp.eq.s32.totalorder %s16, 0
    %p50 = por %p48, %p49
    %s51 = ssub.s32 %s17, %s29
    %s52 = ssub.s32 %s18, %s25
    %s53 = sor.u32 %s51, %s52
    %p54 = scmp.eq.s32.totalorder %s53, 0
    %s56 = sadd.s32 %s55, 1
    %s57 = scalar_select %p54, %s55, %s56
    %p60 = pneg %p54
    %p61 = scmp.eq.s32.totalorder %s10, 1
    %p62 = por %p60, %p61
    %p63 = scmp.ne.s32.totalorder %s55, %s58
    %p64 = scmp.eq.s32.totalorder %s10, 0
    %p65 = por %p63, %p64
    %p66 = scmp.ne.s32.totalorder %s55, %s58
    %p67 = scmp.eq.s32.totalorder %s15, 1
    %p68 = por %p66, %p67
    %p69 = scmp.ne.s32.totalorder %s58, %s59
    %p70 = scmp.eq.s32.totalorder %s15, 0
    %p71 = por %p69, %p70
    %p72 = scmp.ne.s32.totalorder %s58, %s59
    %p73 = scmp.eq.s32.totalorder %s16, 1
    %p74 = por %p72, %p73
    %p76 = scmp.ne.s32.totalorder %s59, %s75
    %p77 = scmp.eq.s32.totalorder %s16, 0
    %p78 = por %p76, %p77
    %s79 = ssub.s32 %s17, %s29
    %s80 = ssub.s32 %s18, %s25
    %s81 = sor.u32 %s79, %s80
    %p82 = scmp.eq.s32.totalorder %s81, 0
    %s84 = sadd.s32 %s83, 1
    %s85 = scalar_select %p82, %s83, %s84
    %p88 = pneg %p82
    %p89 = scmp.eq.s32.totalorder %s10, 1
    %p90 = por %p88, %p89
    %p91 = scmp.ne.s32.totalorder %s83, %s86
    %p92 = scmp.eq.s32.totalorder %s10, 0
    %p93 = por %p91, %p92
    %p94 = scmp.ne.s32.totalorder %s83, %s86
    %p95 = scmp.eq.s32.totalorder %s15, 1
    %p96 = por %p94, %p95
    %p97 = scmp.ne.s32.totalorder %s86, %s87
    %p98 = scmp.eq.s32.totalorder %s15, 0
    %p99 = por %p97, %p98
    %p100 = scmp.ne.s32.totalorder %s86, %s87
    %p101 = scmp.eq.s32.totalorder %s16, 1
    %p102 = por %p100, %p101
    %p104 = scmp.ne.s32.totalorder %s87, %s103
    %p105 = scmp.eq.s32.totalorder %s16, 0
    %p106 = por %p104, %p105
    %s107 = sadd.s32 %s17, %s18
    %s108 = sadd.s32 %s29, %s25
    %s109 = ssub.s32 %s107, %s108
    %p110 = scmp.eq.s32.totalorder %s109, 0
    %s112 = sadd.s32 %s111, 1
    %s113 = scalar_select %p110, %s111, %s112
    %p116 = pneg %p110
    %p117 = scmp.eq.s32.totalorder %s10, 1
    %p118 = por %p116, %p117
    %p119 = scmp.ne.s32.totalorder %s111, %s114
    %p120 = scmp.eq.s32.totalorder %s10, 0
    %p121 = por %p119, %p120
    %p122 = scmp.ne.s32.totalorder %s111, %s114
    %p123 = scmp.eq.s32.totalorder %s15, 1
    %p124 = por %p122, %p123
    %p125 = scmp.ne.s32.totalorder %s114, %s115
    %p126 = scmp.eq.s32.totalorder %s15, 0
    %p127 = por %p125, %p126
    %p128 = scmp.ne.s32.totalorder %s114, %s115
    %p129 = scmp.eq.s32.totalorder %s16, 1
    %p130 = por %p128, %p129
    %p132 = scmp.ne.s32.totalorder %s115, %s131
    %p133 = scmp.eq.s32.totalorder %s16, 0
    %p134 = por %p132, %p133
    %p135 = scmp.le.s32.totalorder 1, %s10
    %p136 = scmp.lt.s32.totalorder %s10, 3
    %p137 = pnand %p135, %p136
    %p138 = pneg %p137
    // Predicated region
    $region9: #{downblock_forward.2} parent=5 // pred_check
      _
    $region10: #{downblock_forward.2} parent=5 // pred_check_branch
      %140 = sbr.rel (%p137) target = $region12
    $region11: #{downblock_forward.2} parent=5 // pred_region
      %s141 = ssub.s32 %s10, 1
      // Predicated region
      $region13: #{downblock_forward.2} parent=11 // pred_check
        %p142 = pneg %p43
      $region14: #{downblock_forward.2} parent=11 // pred_check_branch
        %144 = sbr.rel (%p142) target = $region16
      $region15: #{downblock_forward.2} parent=11 // pred_region
        _
      $region16: #{downblock_forward.2} parent=11 // pred_fallthru
        _
    $region12: #{downblock_forward.2} parent=5 // pred_fallthru
      _
    %p145 = scmp.lt.s32.totalorder %s10, 2
    // Predicated region
    $region17: #{downblock_forward.2} parent=5 // pred_check
      %p146 = pneg %p145
    $region18: #{downblock_forward.2} parent=5 // pred_check_branch
      %148 = sbr.rel (%p146) target = $region20
    $region19: #{downblock_forward.2} parent=5 // pred_region
      // Predicated region
      $region21: #{downblock_forward.2} parent=19 // pred_check
        %p149 = pneg %p65
      $region22: #{downblock_forward.2} parent=19 // pred_check_branch
        %151 = sbr.rel (%p149) target = $region24
      $region23: #{downblock_forward.2} parent=19 // pred_region
        %p152 = scmp.lt.s32.totalorder %s17, 1
        %s153 = scalar_select %p152, %s17, 1
        %p154 = scmp.lt.s32.totalorder %s18, 0
        %s155 = scalar_select %p154, %s18, 0
        %s156 = smul.addr %s153, 6
        %s157 = sadd.s32 %s155, %s156
        %s158 = smul.addr %s157, 4
        %s159 = scalar_lea.vmem %s1, %s158
      $region24: #{downblock_forward.2} parent=19 // pred_fallthru
        _
    $region20: #{downblock_forward.2} parent=5 // pred_fallthru
      _
    %p160 = scmp.le.s32.totalorder 1, %s10
    %p161 = scmp.lt.s32.totalorder %s10, 3
    %p162 = pnand %p160, %p161
    %p163 = pneg %p162
    // Predicated region
    $region25: #{downblock_forward.2} parent=5 // pred_check
      _
    $region26: #{downblock_forward.2} parent=5 // pred_check_branch
      %165 = sbr.rel (%p162) target = $region28
    $region27: #{downblock_forward.2} parent=5 // pred_region
      %s166 = ssub.s32 %s10, 1
      %p167 = pneg %p43
      %p168 = pneg %p40
      %p169 = scmp.lt.s32.totalorder %s19, 1
      %s170 = scalar_select %p169, %s19, 1
      %p171 = scmp.lt.s32.totalorder %s20, 0
      %s172 = scalar_select %p171, %s20, 0
      %s173 = smul.addr %s170, 6
      %s174 = sadd.s32 %s172, %s173
      %s175 = smul.addr %s174, 4
      %s176 = scalar_lea.vmem %s1, %s175
      %p177 = pneg %p71
      %p178 = pneg %p68
      %p179 = pneg %p99
      %p180 = pneg %p96
      %p181 = scmp.lt.s32.totalorder %s19, 1
      %s182 = scalar_select %p181, %s19, 1
      %p183 = scmp.lt.s32.totalorder %s20, 0
      %s184 = scalar_select %p183, %s20, 0
      %s185 = smul.addr %s182, 2
      %s186 = sadd.s32 %s184, %s185
      %s187 = smul.addr %s186, 4
      %s188 = scalar_lea.vmem %s2, %s187
      %p189 = pneg %p127
      %p190 = pneg %p124
      %s191 = sadd.s32 %s19, %s20
      %p192 = scmp.lt.s32.totalorder %s191, 1
      %s193 = scalar_select %p192, %s191, 1
      %s194 = smul.addr %s193, 2
      %s195 = smul.addr %s194, 8
      %s196 = scalar_lea.vmem %s3, %s195
      %p197 = scmp.lt.s32.totalorder %s19, 1
      %s198 = scalar_select %p197, %s19, 1
      %p199 = scmp.lt.s32.totalorder %s20, 0
      %s200 = scalar_select %p199, %s20, 0
      %s201 = smul.addr %s198, 6
      %s202 = sadd.s32 %s200, %s201
      %s203 = smul.addr %s202, 4
      %s204 = scalar_lea.vmem %s1, %s203
      %p205 = scmp.lt.s32.totalorder %s19, 1
      %s206 = scalar_select %p205, %s19, 1
      %p207 = scmp.lt.s32.totalorder %s20, 0
      %s208 = scalar_select %p207, %s20, 0
      %s209 = smul.addr %s206, 2
      %s210 = sadd.s32 %s208, %s209
      %s211 = smul.addr %s210, 4
      %s212 = scalar_lea.vmem %s2, %s211
      %s213 = sadd.s32 %s19, %s20
      %p214 = scmp.lt.s32.totalorder %s213, 1
      %s215 = scalar_select %p214, %s213, 1
      %s216 = smul.addr %s215, 2
      %s217 = smul.addr %s216, 8
      %s218 = scalar_lea.vmem %s3, %s217
      %s219 = sadd.s32 %s19, %s20
      %v221 = vld [vmem:[%s0] sm:$0xf]
      %v222 = vld [vmem:[%s0 + $0x4] sm:$0xf]
      %v223 = vld [vmem:[%s204] sm:$0xf]
      %v224 = vld [vmem:[%s204 + $0x4] sm:$0xf]
      %v225 = vld [vmem:[%s204 + $0x8] sm:$0xf]
      %v226 = vld [vmem:[%s204 + $0xc] sm:$0xf]
      %v227 = vld [vmem:[%s204 + $0x10] sm:$0xf]
      %v228 = vld [vmem:[%s204 + $0x14] sm:$0xf]
      %v231 = vunpack.c.l.b16 %v221
      %v232 = vunpack.c.l.b16 %v222
      %v233 = vpack.c.b16 %v232, %v231
      %v240 = vunpack.c.l.b16 %v223
      %v241 = vunpack.c.l.b16 %v224
      %v242 = vunpack.c.l.b16 %v225
      %v243 = vunpack.c.l.b16 %v226
      %v244 = vunpack.c.l.b16 %v227
      %v245 = vunpack.c.l.b16 %v228
      %v246 = vpack.c.b16 %v241, %v240
      %v247 = vpack.c.b16 %v243, %v242
      %v248 = vpack.c.b16 %v245, %v244
      %vm252 = vcmask 392192
      %v254 = vsel %vm252, %v233, 0
      %256 = vmatpush.bf16.msra.mxu0 0
      %257 = vmatpush.bf16.msra.mxu0 0
      %258 = vmatpush.bf16.msra.mxu0 0
      %259 = vmatpush.bf16.msra.mxu0 0
      %260 = vmatpush.bf16.msra.mxu0 0
      %261 = vmatpush.bf16.msra.mxu0 %v248
      %262 = vmatpush.bf16.msra.mxu0 %v247
      %263 = vmatpush.bf16.msra.mxu0 %v246
      %264 = vmatmul.bf16.gmra.mxu0 %v254
      %v265 = vpop.f32.mrf.mxu0
      %v266 = vadd.f32 0.0, %v265
      %v267 = vpop.f32.mrf.mxu0
      %v268 = vadd.f32 0.0, %v267
      %269 = vdwg.mxu0
      %v270 = vpack.c.bf16 %v266, %v266
      %v271 = vpack.c.bf16 %v268, %v268
      %272 = vst [vmem:[%s212] sm:$0xf] %v270
      %273 = vst [vmem:[%s212 + $0x4] sm:$0xf] %v271
      %274 = vadd.xlane.f32.xlu0 %v266
      %v275 = vpop.xlane.xlu0 %274
      %276 = vadd.xlane.f32.xlu0 %v268
      %v277 = vpop.xlane.xlu0 %276
      %vm278 = vcmask 7168
      %279 = vst.msk [vmem:[%s218] sm:$0xff] %vm278, %v275
      %280 = vst.msk [vmem:[%s218 + $0x8] sm:$0xff] %vm278, %v277
      %v281 = vmul.f32 %v266, %v266
      %v282 = vmul.f32 %v268, %v268
      %283 = vadd.xlane.f32.xlu0 %v281
      %v284 = vpop.xlane.xlu0 %283
      %285 = vadd.xlane.f32.xlu0 %v282
      %v286 = vpop.xlane.xlu0 %285
      %vm287 = vcmask 15368
      %288 = vst.msk [vmem:[%s218] sm:$0xff] %vm287, %v284
      %289 = vst.msk [vmem:[%s218 + $0x8] sm:$0xff] %vm287, %v286
      %p290 = scmp.lt.s32.totalorder %s19, 1
      %s291 = scalar_select %p290, %s19, 1
      %p292 = scmp.lt.s32.totalorder %s20, 0
      %s293 = scalar_select %p292, %s20, 0
      %s294 = smul.addr %s291, 2
      %s295 = sadd.s32 %s293, %s294
      %s296 = smul.addr %s295, 4
      %s297 = scalar_lea.vmem %s2, %s296
      %s298 = sadd.s32 %s19, %s20
      %p299 = scmp.lt.s32.totalorder %s298, 1
      %s300 = scalar_select %p299, %s298, 1
      %s301 = smul.addr %s300, 2
      %s302 = smul.addr %s301, 8
      %s303 = scalar_lea.vmem %s3, %s302
      // Predicated region
      $region29: #{downblock_forward.2} parent=27 // pred_check
        %p304 = pneg %p96
      $region30: #{downblock_forward.2} parent=27 // pred_check_branch
        %306 = sbr.rel (%p304) target = $region32
      $region31: #{downblock_forward.2} parent=27 // pred_region
        _
      $region32: #{downblock_forward.2} parent=27 // pred_fallthru
        _
      // Predicated region
      $region33: #{downblock_forward.2} parent=27 // pred_check
        %p307 = pneg %p124
      $region34: #{downblock_forward.2} parent=27 // pred_check_branch
        %309 = sbr.rel (%p307) target = $region36
      $region35: #{downblock_forward.2} parent=27 // pred_region
        %s310 = sadd.s32 %s19, %s20
      $region36: #{downblock_forward.2} parent=27 // pred_fallthru
        _
    $region28: #{downblock_forward.2} parent=5 // pred_fallthru
      _
    %p311 = scmp.le.s32.totalorder 2, %s10
    // Predicated region
    $region37: #{downblock_forward.2} parent=5 // pred_check
      %p312 = pneg %p311
    $region38: #{downblock_forward.2} parent=5 // pred_check_branch
      %314 = sbr.rel (%p312) target = $region40
    $region39: #{downblock_forward.2} parent=5 // pred_region
      %s315 = ssub.s32 %s10, 2
      // Predicated region
      $region41: #{downblock_forward.2} parent=39 // pred_check
        %p316 = pneg %p102
      $region42: #{downblock_forward.2} parent=39 // pred_check_branch
        %318 = sbr.rel (%p316) target = $region44
      $region43: #{downblock_forward.2} parent=39 // pred_region
        %p319 = scmp.lt.s32.totalorder %s21, 1
        %s320 = scalar_select %p319, %s21, 1
        %p321 = scmp.lt.s32.totalorder %s22, 0
        %s322 = scalar_select %p321, %s22, 0
        %s323 = smul.addr %s320, 2
        %s324 = sadd.s32 %s322, %s323
        %s325 = smul.addr %s324, 4
        %s326 = scalar_lea.vmem %s2, %s325
      $region44: #{downblock_forward.2} parent=39 // pred_fallthru
        _
      // Predicated region
      $region45: #{downblock_forward.2} parent=39 // pred_check
        %p327 = pneg %p130
      $region46: #{downblock_forward.2} parent=39 // pred_check_branch
        %329 = sbr.rel (%p327) target = $region48
      $region47: #{downblock_forward.2} parent=39 // pred_region
        %s330 = sadd.s32 %s21, %s22
        %p331 = scmp.lt.s32.totalorder %s330, 1
        %s332 = scalar_select %p331, %s330, 1
        %s333 = smul.addr %s332, 2
        %s334 = smul.addr %s333, 8
        %s335 = scalar_lea.vmem %s3, %s334
      $region48: #{downblock_forward.2} parent=39 // pred_fallthru
        _
    $region40: #{downblock_forward.2} parent=5 // pred_fallthru
      _
  $region6: #{downblock_forward.2} parent=0 // loop_footer
    %s14 = sadd.s32 1, %s10
  $region7: #{downblock_forward.2} parent=0 // loop_footer_branch
    %9 = sbr.rel target = $region3
  $region8: #{downblock_forward.2} parent=0 // loop_exit
    _

// kernel: downblock_forward.3
$region0: #{downblock_forward.3}
  #allocation0 [shape = 'u32[]', space=smem, size = 0x4, offset = 0x4, fixed_abs, tag = 'smem constant byte address 0x4 - core index']
  #allocation1 [shape = 'u32[72,128]{1,0:T(1,128)}', space=vmem, size = 0x9000, scoped, tag = 'internal scratch']
  %s0 = inlined_call_operand.vmem [shape: bf16[2,16,128], index: 0, kind: input, shape index: {}]
  %s1 = inlined_call_operand.vmem [shape: f32[16,2], index: 1, kind: input, shape index: {}]
  %s2 = inlined_call_operand.vmem [shape: f32[2,8,128], index: 2, kind: output, shape index: {}]
  %s3 = sld [smem:[#allocation0]]
  $region41: #{downblock_forward.3} parent=0
    _
  %s5 = ssub.s32 1, %s3
  %s6 = scalar_select 0, %s5, %s3
  loop: start=0, step=1, limit=4
  $region2: #{downblock_forward.3} parent=0 // loop_pre_header
    _
  $region3: #{downblock_forward.3} parent=0 // loop_header
    %s8 = sphi 0, %s12
    %p9 = scmp.ge.s32.totalorder %s8, 4
    %s15 = sphi 0, %s27
    %s16 = sphi 0, %s23
    %s17 = sphi 0, %s15
    %s18 = sphi 0, %s16
    %s19 = sphi 0, %s17
    %s20 = sphi 0, %s18
    %s32 = sphi 0, %s34
    %s35 = sphi 0, %s32
    %s36 = sphi 0, %s35
    %s52 = sphi 0, %s36
    %s56 = sphi 0, %s56
    %s58 = sphi 0, %s56
    %s59 = sphi 0, %s58
    %s73 = sphi 0, %s59
    %s81 = sphi 0, %s83
    %s84 = sphi 0, %s81
    %s85 = sphi 0, %s84
    %s101 = sphi 0, %s85
  $region4: #{downblock_forward.3} parent=0 // loop_header_branch
    %11 = sbr.rel (%p9) target = $region8
  $region5: #{downblock_forward.3} parent=0 // loop_body
    %s13 = ssub.s32 %s8, 1
    %s14 = ssub.s32 %s8, 2
    %s21 = sadd.s32 1, %s16
    %p22 = scmp.ge.s32.totalorder %s21, 1
    %s23 = scalar_select %p22, 0, %s21
    %s24 = sadd.s32 1, %s15
    %s25 = scalar_select %p22, %s24, %s15
    %p26 = scmp.ge.s32.totalorder %s25, 2
    %s27 = scalar_select %p26, 0, %s25
    %s28 = ssub.s32 %s15, %s27
    %s29 = ssub.s32 %s16, %s23
    %s30 = sor.u32 %s28, %s29
    %p31 = scmp.eq.s32.totalorder %s30, 0
    %s33 = sadd.s32 %s32, 1
    %s34 = scalar_select %p31, %s32, %s33
    %p37 = pneg %p31
    %p38 = scmp.eq.s32.totalorder %s8, 1
    %p39 = por %p37, %p38
    %p40 = scmp.ne.s32.totalorder %s32, %s35
    %p41 = scmp.eq.s32.totalorder %s8, 0
    %p42 = por %p40, %p41
    %p43 = scmp.ne.s32.totalorder %s32, %s35
    %p44 = scmp.eq.s32.totalorder %s13, 1
    %p45 = por %p43, %p44
    %p46 = scmp.ne.s32.totalorder %s35, %s36
    %p47 = scmp.eq.s32.totalorder %s13, 0
    %p48 = por %p46, %p47
    %p49 = scmp.ne.s32.totalorder %s35, %s36
    %p50 = scmp.eq.s32.totalorder %s14, 1
    %p51 = por %p49, %p50
    %p53 = scmp.ne.s32.totalorder %s36, %s52
    %p54 = scmp.eq.s32.totalorder %s14, 0
    %p55 = por %p53, %p54
    %s57 = sadd.s32 %s56, 1
    %p60 = scmp.eq.s32.totalorder %s8, 1
    %p61 = scmp.ne.s32.totalorder %s56, %s58
    %p62 = scmp.eq.s32.totalorder %s8, 0
    %p63 = por %p61, %p62
    %p64 = scmp.ne.s32.totalorder %s56, %s58
    %p65 = scmp.eq.s32.totalorder %s13, 1
    %p66 = por %p64, %p65
    %p67 = scmp.ne.s32.totalorder %s58, %s59
    %p68 = scmp.eq.s32.totalorder %s13, 0
    %p69 = por %p67, %p68
    %p70 = scmp.ne.s32.totalorder %s58, %s59
    %p71 = scmp.eq.s32.totalorder %s14, 1
    %p72 = por %p70, %p71
    %p74 = scmp.ne.s32.totalorder %s59, %s73
    %p75 = scmp.eq.s32.totalorder %s14, 0
    %p76 = por %p74, %p75
    %s77 = ssub.s32 %s15, %s27
    %s78 = ssub.s32 %s16, %s23
    %s79 = sor.u32 %s77, %s78
    %p80 = scmp.eq.s32.totalorder %s79, 0
    %s82 = sadd.s32 %s81, 1
    %s83 = scalar_select %p80, %s81, %s82
    %p86 = pneg %p80
    %p87 = scmp.eq.s32.totalorder %s8, 1
    %p88 = por %p86, %p87
    %p89 = scmp.ne.s32.totalorder %s81, %s84
    %p90 = scmp.eq.s32.totalorder %s8, 0
    %p91 = por %p89, %p90
    %p92 = scmp.ne.s32.totalorder %s81, %s84
    %p93 = scmp.eq.s32.totalorder %s13, 1
    %p94 = por %p92, %p93
    %p95 = scmp.ne.s32.totalorder %s84, %s85
    %p96 = scmp.eq.s32.totalorder %s13, 0
    %p97 = por %p95, %p96
    %p98 = scmp.ne.s32.totalorder %s84, %s85
    %p99 = scmp.eq.s32.totalorder %s14, 1
    %p100 = por %p98, %p99
    %p102 = scmp.ne.s32.totalorder %s85, %s101
    %p103 = scmp.eq.s32.totalorder %s14, 0
    %p104 = por %p102, %p103
    %p105 = scmp.le.s32.totalorder 1, %s8
    %p106 = scmp.lt.s32.totalorder %s8, 3
    %p107 = pnand %p105, %p106
    %p108 = pneg %p107
    // Predicated region
    $region9: #{downblock_forward.3} parent=5 // pred_check
      _
    $region10: #{downblock_forward.3} parent=5 // pred_check_branch
      %110 = sbr.rel (%p107) target = $region12
    $region11: #{downblock_forward.3} parent=5 // pred_region
      %s111 = ssub.s32 %s8, 1
      // Predicated region
      $region13: #{downblock_forward.3} parent=11 // pred_check
        %p112 = pneg %p69
      $region14: #{downblock_forward.3} parent=11 // pred_check_branch
        %114 = sbr.rel (%p112) target = $region16
      $region15: #{downblock_forward.3} parent=11 // pred_region
        _
      $region16: #{downblock_forward.3} parent=11 // pred_fallthru
        _
    $region12: #{downblock_forward.3} parent=5 // pred_fallthru
      _
    %p115 = scmp.lt.s32.totalorder %s8, 2
    // Predicated region
    $region17: #{downblock_forward.3} parent=5 // pred_check
      %p116 = pneg %p115
    $region18: #{downblock_forward.3} parent=5 // pred_check_branch
      %118 = sbr.rel (%p116) target = $region20
    $region19: #{downblock_forward.3} parent=5 // pred_region
      // Predicated region
      $region21: #{downblock_forward.3} parent=19 // pred_check
        %p119 = pneg %p42
      $region22: #{downblock_forward.3} parent=19 // pred_check_branch
        %121 = sbr.rel (%p119) target = $region24
      $region23: #{downblock_forward.3} parent=19 // pred_region
        %p122 = scmp.lt.s32.totalorder %s15, 1
        %s123 = scalar_select %p122, %s15, 1
        %p124 = scmp.lt.s32.totalorder %s16, 0
        %s125 = scalar_select %p124, %s16, 0
        %s126 = smul.addr %s123, 2
        %s127 = sadd.s32 %s125, %s126
        %s128 = smul.addr %s127, 4
        %s129 = scalar_lea.vmem %s0, %s128
      $region24: #{downblock_forward.3} parent=19 // pred_fallthru
        _
    $region20: #{downblock_forward.3} parent=5 // pred_fallthru
      _
    %p130 = scmp.le.s32.totalorder 1, %s8
    %p131 = scmp.lt.s32.totalorder %s8, 3
    %p132 = pnand %p130, %p131
    %p133 = pneg %p132
    // Predicated region
    $region25: #{downblock_forward.3} parent=5 // pred_check
      _
    $region26: #{downblock_forward.3} parent=5 // pred_check_branch
      %135 = sbr.rel (%p132) target = $region28
    $region27: #{downblock_forward.3} parent=5 // pred_region
      %s136 = ssub.s32 %s8, 1
      %p137 = scmp.lt.s32.totalorder %s17, 1
      %s138 = scalar_select %p137, %s17, 1
      %p139 = scmp.lt.s32.totalorder %s18, 0
      %s140 = scalar_select %p139, %s18, 0
      %s141 = smul.addr %s138, 2
      %s142 = sadd.s32 %s140, %s141
      %s143 = smul.addr %s142, 4
      %s144 = scalar_lea.vmem %s0, %s143
      %p145 = pneg %p48
      %p146 = pneg %p45
      %p147 = pneg %p69
      %p148 = pneg %p66
      %p149 = pneg %p97
      %p150 = pneg %p94
      %p151 = scmp.lt.s32.totalorder %s17, 1
      %s152 = scalar_select %p151, %s17, 1
      %p153 = scmp.lt.s32.totalorder %s18, 0
      %s154 = scalar_select %p153, %s18, 0
      %s155 = sadd.s32 %s154, %s152
      %s156 = smul.addr %s155, 8
      %s157 = scalar_lea.vmem %s2, %s156
      %p158 = scmp.lt.s32.totalorder %s17, 1
      %s159 = scalar_select %p158, %s17, 1
      %p160 = scmp.lt.s32.totalorder %s18, 0
      %s161 = scalar_select %p160, %s18, 0
      %s162 = smul.addr %s159, 2
      %s163 = sadd.s32 %s161, %s162
      %s164 = smul.addr %s163, 4
      %s165 = scalar_lea.vmem %s0, %s164
      %p166 = scmp.lt.s32.totalorder %s17, 1
      %s167 = scalar_select %p166, %s17, 1
      %p168 = scmp.lt.s32.totalorder %s18, 0
      %s169 = scalar_select %p168, %s18, 0
      %s170 = sadd.s32 %s169, %s167
      %s171 = smul.addr %s170, 8
      %s172 = scalar_lea.vmem %s2, %s171
      %v173 = vld [vmem:[%s165] sm:$0xf]
      %v174 = vunpack.c.l.bf16 %v173
      %v175 = vld [vmem:[%s1] sm:$0xff]
      %177 = vset.pattern.permute.xlu0 0
      %178 = vperm.xlu0 %177, %v175
      %v179 = vpop.permute.xlu0 %178
      %v181 = vmul.f32 %v174, %v179
      %182 = vset.pattern.permute.xlu0 1
      %183 = vperm.xlu0 %182, %v175
      %v184 = vpop.permute.xlu0 %183
      %v186 = vadd.f32 %v181, %v184
      %vm187 = vcmp.ge.f32.partialorder %v186, 0.0
      %v188 = vmul.f32 %v186, 0.2
      %v189 = vsel %vm187, %v186, %v188
      %190 = vst [vmem:[%s172] sm:$0xff] %v189
      %p191 = scmp.lt.s32.totalorder %s17, 1
      %s192 = scalar_select %p191, %s17, 1
      %p193 = scmp.lt.s32.totalorder %s18, 0
      %s194 = scalar_select %p193, %s18, 0
      %s195 = sadd.s32 %s194, %s192
      %s196 = smul.addr %s195, 8
      %s197 = scalar_lea.vmem %s2, %s196
      // Predicated region
      $region29: #{downblock_forward.3} parent=27 // pred_check
        %p198 = pneg %p94
      $region30: #{downblock_forward.3} parent=27 // pred_check_branch
        %200 = sbr.rel (%p198) target = $region32
      $region31: #{downblock_forward.3} parent=27 // pred_region
        _
      $region32: #{downblock_forward.3} parent=27 // pred_fallthru
        _
    $region28: #{downblock_forward.3} parent=5 // pred_fallthru
      _
    %p201 = scmp.le.s32.totalorder 2, %s8
    // Predicated region
    $region33: #{downblock_forward.3} parent=5 // pred_check
      %p202 = pneg %p201
    $region34: #{downblock_forward.3} parent=5 // pred_check_branch
      %204 = sbr.rel (%p202) target = $region36
    $region35: #{downblock_forward.3} parent=5 // pred_region
      %s205 = ssub.s32 %s8, 2
      // Predicated region
      $region37: #{downblock_forward.3} parent=35 // pred_check
        %p206 = pneg %p100
      $region38: #{downblock_forward.3} parent=35 // pred_check_branch
        %208 = sbr.rel (%p206) target = $region40
      $region39: #{downblock_forward.3} parent=35 // pred_region
        %p209 = scmp.lt.s32.totalorder %s19, 1
        %s210 = scalar_select %p209, %s19, 1
        %p211 = scmp.lt.s32.totalorder %s20, 0
        %s212 = scalar_select %p211, %s20, 0
        %s213 = sadd.s32 %s212, %s210
        %s214 = smul.addr %s213, 8
        %s215 = scalar_lea.vmem %s2, %s214
      $region40: #{downblock_forward.3} parent=35 // pred_fallthru
        _
    $region36: #{downblock_forward.3} parent=5 // pred_fallthru
      _
  $region6: #{downblock_forward.3} parent=0 // loop_footer
    %s12 = sadd.s32 1, %s8
  $region7: #{downblock_forward.3} parent=0 // loop_footer_branch
    %7 = sbr.rel target = $region3
  $region8: #{downblock_forward.3} parent=0 // loop_exit
    _

</llo_original>
